<compile_context>
chip_gen: v7x
topology: tpu7x:2x2x1
jax: 0.10.0
libtpu: 0.0.40
codegen_flags: <defaults>
</compile_context>

<pallas_src>
import functools

import jax
import jax.numpy as jnp
from jax import lax
from jax.experimental import pallas as pl
from jax.experimental.pallas import tpu as pltpu

_LANE = 128  # TPU lane width: last dim of every block should be a multiple of this.


def _fused_causal_attn_kernel(scale, x_ref, wqkv_ref, bias_ref, o_ref):
    """One grid step: Bb batch rows of causal self-attention.

    x_ref    : (Bb*S, Dp)  bf16 -- Bb batch rows, flattened for the fused QKV matmul
    wqkv_ref : (Dp, 3*Dp)  bf16 -- fused [Wq^T | Wk^T | Wv^T], lane-padded
    bias_ref : (S, S)      f32  -- additive causal bias (0 on/below diag, -1e30 above)
    o_ref    : (Bb, S, Dp) f32
    """
    Bb, S, Dp = o_ref.shape

    # One wide MXU pass for Q, K, V (bf16 operands, f32 accumulation).
    qkv = jnp.dot(x_ref[...], wqkv_ref[...], preferred_element_type=jnp.float32)

    # Static, lane-aligned slices; fold the 1/sqrt(D) scale onto Q (not scores).
    # NOTE: the reshapes only split the leading/sublane dims (S multiple of 8),
    # so they are layout-preserving; the bf16 cast happens after, right before
    # the MXU consumes them.
    q = (qkv[:, :Dp] * scale).reshape(Bb, S, Dp).astype(jnp.bfloat16)
    k = qkv[:, Dp:2 * Dp].reshape(Bb, S, Dp).astype(jnp.bfloat16)
    v = qkv[:, 2 * Dp:].reshape(Bb, S, Dp).astype(jnp.bfloat16)

    # Q @ K^T without an explicit transpose: contract the last dim of both.
    scores = jnp.einsum("bqd,bkd->bqk", q, k, preferred_element_type=jnp.float32)

    # Hoisted causal mask: a plain add of the precomputed additive bias.
    scores = scores + bias_ref[...][None, :, :]

    # Numerically-stable softmax in f32; the divide goes to the EUP slot.
    m = jnp.max(scores, axis=-1, keepdims=True)
    e = jnp.exp(scores - m)
    denom = jnp.sum(e, axis=-1, keepdims=True)
    p = e * pl.reciprocal(denom, approx=True)

    # P @ V on the MXU (bf16 operands, f32 accumulation).
    out = jnp.einsum("bqk,bkd->bqd", p.astype(jnp.bfloat16), v,
                     preferred_element_type=jnp.float32)
    o_ref[...] = out.astype(o_ref.dtype)


def _pick_block_b(batch, seq_len):
    """Batch rows per grid step.

    Targets >= 128 rows of fused-QKV work per step (amortizes per-step
    overhead), keeps >= 2 grid steps when the batch allows it (megacore
    sharding on v7x), respects the (16, 128) bf16 tiling of the flattened
    input block, and bounds the per-step VMEM footprint.
    """
    max_rows = 2048
    candidates = [d for d in range(1, batch + 1)
                  if batch % d == 0
                  and (d == batch or (d * seq_len) % 16 == 0)
                  and d * seq_len <= max_rows]
    for d in candidates:
        if d * seq_len >= 128 and batch // d >= 2:
            return d
    return candidates[-1] if candidates else batch


def unidirectional_self_attention(x, wq, wk, wv):
    """Causal self-attention matching SASRec's UnidirectionalSelfAttention.

    x          : (B, S, D) activations.
    wq, wk, wv : (D, D) PyTorch nn.Linear weights (out_features, in_features),
                 no bias. The wrapper pre-transposes them so the kernel runs x @ W.
    """
    B, S, D = x.shape
    out_dtype = x.dtype
    scale = 1.0 / (D ** 0.5)  # uses the *original* embedding dim, not the padded one

    # Lane-dense embedding dim: zero-pad D up to a multiple of 128. Exact:
    # padded weight rows/cols are zero, so scores and outputs are unchanged.
    Dp = pl.cdiv(D, _LANE) * _LANE
    pad_d = Dp - D

    def pad_wt(w):  # (D, D) torch (out, in) layout -> (Dp, Dp) laid out as (in, out)
        return jnp.pad(w.T, ((0, pad_d), (0, pad_d)))

    # Fused [Wq^T | Wk^T | Wv^T] as a single bf16 MXU operand.
    wqkv = jnp.concatenate([pad_wt(wq), pad_wt(wk), pad_wt(wv)], axis=1)
    wqkv = wqkv.astype(jnp.bfloat16)                      # (Dp, 3*Dp)

    # Activations: pad, cast to bf16 (halves DMA), flatten (B, S) -> rows so each
    # grid step projects Bb*S rows in one lane-dense matmul.
    x_rows = jnp.pad(x, ((0, 0), (0, 0), (0, pad_d)))
    x_rows = x_rows.astype(jnp.bfloat16).reshape(B * S, Dp)

    # Additive causal bias built once outside the (serial) grid loop. Finite
    # -1e30 instead of -inf so fully-masked rows could never produce NaN.
    row = lax.broadcasted_iota(jnp.int32, (S, S), 0)
    col = lax.broadcasted_iota(jnp.int32, (S, S), 1)
    bias = jnp.where(col <= row, 0.0, -1e30).astype(jnp.float32)

    Bb = _pick_block_b(B, S)
    grid = (B // Bb,)

    out_p = pl.pallas_call(
        functools.partial(_fused_causal_attn_kernel, scale),
        out_shape=jax.ShapeDtypeStruct((B, S, Dp), out_dtype),
        grid_spec=pltpu.PrefetchScalarGridSpec(
            num_scalar_prefetch=0,
            grid=grid,
            in_specs=[
                # Bb*S flattened activation rows per step.
                pl.BlockSpec((Bb * S, Dp), lambda b: (b, 0)),
                # Fused QKV weight: constant block index -> fetched once, resident.
                # NOTE: for large D, add pipeline_mode=pl.Buffered(1) here to drop
                # the unneeded double buffer of this constant-index block.
                pl.BlockSpec((Dp, 3 * Dp), lambda b: (0, 0)),
                # Precomputed causal bias, also constant across the grid.
                pl.BlockSpec((S, S), lambda b: (0, 0)),
            ],
            out_specs=pl.BlockSpec((Bb, S, Dp), lambda b: (b, 0, 0)),
        ),
        compiler_params=pltpu.CompilerParams(
            dimension_semantics=("parallel",),
            # Explicit scoped-VMEM budget with headroom on every generation
            # (v5e/v6e: 128 MiB physical, v7x: 64 MiB physical).
            vmem_limit_bytes=32 * 1024 * 1024,
        ),
    )(x_rows, wqkv, bias)

    # Drop the lane padding (XLA glue, outside the kernel).
    return out_p[:, :, :D]


def _reference(x, wq, wk, wv):
    """Pure-JAX f32 reference mirroring the PyTorch forward exactly."""
    B, S, D = x.shape
    q = x @ wq.T
    k = x @ wk.T
    v = x @ wv.T
    scores = jnp.einsum("bqd,bkd->bqk", q, k) / (D ** 0.5)
    mask = jnp.tril(jnp.ones((S, S), dtype=bool))[None]
    scores = jnp.where(mask, scores, -jnp.inf)
    weights = jax.nn.softmax(scores, axis=-1)
    return weights @ v


if __name__ == "__main__":
    # SASRec's default embedding_dim=64; small batch/sequence for the demo.
    B, S, D = 2, 8, 64
    key = jax.random.PRNGKey(0)
    kx, kq, kk, kv = jax.random.split(key, 4)

    x = jax.random.normal(kx, (B, S, D), dtype=jnp.float32)
    # Deterministic "Linear" weights, shape (out_features, in_features), no bias.
    wscale = 1.0 / (D ** 0.5)
    wq = jax.random.uniform(kq, (D, D), jnp.float32, -wscale, wscale)
    wk = jax.random.uniform(kk, (D, D), jnp.float32, -wscale, wscale)
    wv = jax.random.uniform(kv, (D, D), jnp.float32, -wscale, wscale)

    out = unidirectional_self_attention(x, wq, wk, wv)
    out = jax.block_until_ready(out)

    ref = _reference(x, wq, wk, wv)
    assert out.shape == ref.shape
    # bf16 MXU operands + approx reciprocal => compare at bf16-level tolerance.
    assert jnp.allclose(out, ref, atol=2e-2, rtol=2e-2), (
        "mismatch vs reference: max abs err = "
        f"{float(jnp.max(jnp.abs(out - ref)))}")

    print("KERNEL_OK")
</pallas_src>

<mosaic_0001>
module attributes {stable_mosaic.version = 11 : i64} {
  func.func @_fused_causal_attn_kernel(%arg0: i32, %arg1: memref<16x128xbf16, #tpu.memory_space<vmem>>, %arg2: memref<128x384xbf16, #tpu.memory_space<vmem>>, %arg3: memref<8x8xf32, #tpu.memory_space<vmem>>, %arg4: memref<2x8x128xf32, #tpu.memory_space<vmem>>) attributes {dimension_semantics = [#tpu.dimension_semantics<parallel>], iteration_bounds = array<i64: 1>, scalar_prefetch = 0 : i64, scratch_operands = 0 : i64, tpu.core_type = #tpu.core_type<tc>, window_params = [{transform_indices = @transform_0, window_bounds = array<i64: 16, 128>}, {pipeline_mode = #tpu.pipeline_mode<synchronous>, transform_indices = @transform_1, window_bounds = array<i64: 128, 384>}, {pipeline_mode = #tpu.pipeline_mode<synchronous>, transform_indices = @transform_2, window_bounds = array<i64: 8, 8>}, {transform_indices = @transform_3, window_bounds = array<i64: 2, 8, 128>}]} {
    %c0 = arith.constant 0 : index
    %c0_0 = arith.constant 0 : index
    %0 = vector.load %arg1[%c0, %c0_0] : memref<16x128xbf16, #tpu.memory_space<vmem>>, vector<16x128xbf16>
    %c0_1 = arith.constant 0 : index
    %c0_2 = arith.constant 0 : index
    %1 = vector.load %arg2[%c0_1, %c0_2] : memref<128x384xbf16, #tpu.memory_space<vmem>>, vector<128x384xbf16>
    %cst = arith.constant dense<0.000000e+00> : vector<16x384xf32>
    %2 = tpu.matmul %0, %1, %cst {dimension_numbers = #tpu.dot_dimension_numbers<[1], [0], [0], [1], [0, 0, 1, 1], [], []>} : vector<16x128xbf16>, vector<128x384xbf16>, vector<16x384xf32> -> vector<16x384xf32>
    %3 = vector.extract_strided_slice %2 {offsets = [0, 0], sizes = [16, 128], strides = [1, 1]} : vector<16x384xf32> to vector<16x128xf32>
    %cst_3 = arith.constant 1.250000e-01 : f32
    %4 = vector.broadcast %cst_3 : f32 to vector<16x128xf32>
    %5 = arith.mulf %3, %4 : vector<16x128xf32>
    %6 = vector.shape_cast %5 : vector<16x128xf32> to vector<2x8x128xf32>
    %7 = arith.truncf %6 : vector<2x8x128xf32> to vector<2x8x128xbf16>
    %8 = vector.extract_strided_slice %2 {offsets = [0, 128], sizes = [16, 128], strides = [1, 1]} : vector<16x384xf32> to vector<16x128xf32>
    %9 = vector.shape_cast %8 : vector<16x128xf32> to vector<2x8x128xf32>
    %10 = arith.truncf %9 : vector<2x8x128xf32> to vector<2x8x128xbf16>
    %11 = vector.extract_strided_slice %2 {offsets = [0, 256], sizes = [16, 128], strides = [1, 1]} : vector<16x384xf32> to vector<16x128xf32>
    %12 = vector.shape_cast %11 : vector<16x128xf32> to vector<2x8x128xf32>
    %13 = arith.truncf %12 : vector<2x8x128xf32> to vector<2x8x128xbf16>
    "tpu.trace_start"() <{level = 10 : i32, message = "bqd,bkd->bqk"}> : () -> ()
    %cst_4 = arith.constant dense<0.000000e+00> : vector<2x8x8xf32>
    %14 = tpu.matmul %7, %10, %cst_4 {dimension_numbers = #tpu.dot_dimension_numbers<[2], [2], [1], [1], [0, 0, 0, 1, 1, 1], [0], [0]>} : vector<2x8x128xbf16>, vector<2x8x128xbf16>, vector<2x8x8xf32> -> vector<2x8x8xf32>
    "tpu.trace_stop"() : () -> ()
    %c0_5 = arith.constant 0 : index
    %c0_6 = arith.constant 0 : index
    %15 = vector.load %arg3[%c0_5, %c0_6] : memref<8x8xf32, #tpu.memory_space<vmem>>, vector<8x8xf32>
    %16 = vector.shape_cast %15 : vector<8x8xf32> to vector<1x8x8xf32>
    %17 = vector.broadcast %16 : vector<1x8x8xf32> to vector<2x8x8xf32>
    %18 = arith.addf %14, %17 : vector<2x8x8xf32>
    %cst_7 = arith.constant dense<0xFF800000> : vector<2x8xf32>
    %19 = vector.multi_reduction <maximumf>, %18, %cst_7 [2] : vector<2x8x8xf32> to vector<2x8xf32>
    %20 = vector.shape_cast %19 : vector<2x8xf32> to vector<2x8x1xf32>
    %21 = vector.broadcast %20 : vector<2x8x1xf32> to vector<2x8x8xf32>
    %22 = arith.subf %18, %21 : vector<2x8x8xf32>
    %23 = math.exp %22 : vector<2x8x8xf32>
    %cst_8 = arith.constant dense<0.000000e+00> : vector<2x8xf32>
    %24 = vector.multi_reduction <add>, %23, %cst_8 [2] : vector<2x8x8xf32> to vector<2x8xf32>
    %25 = vector.shape_cast %24 : vector<2x8xf32> to vector<2x8x1xf32>
    %26 = tpu.reciprocal %25 {approx = true} : vector<2x8x1xf32> -> vector<2x8x1xf32>
    %27 = vector.broadcast %26 : vector<2x8x1xf32> to vector<2x8x8xf32>
    %28 = arith.mulf %23, %27 : vector<2x8x8xf32>
    %29 = arith.truncf %28 : vector<2x8x8xf32> to vector<2x8x8xbf16>
    "tpu.trace_start"() <{level = 10 : i32, message = "bqk,bkd->bqd"}> : () -> ()
    %cst_9 = arith.constant dense<0.000000e+00> : vector<2x8x128xf32>
    %30 = tpu.matmul %29, %13, %cst_9 {dimension_numbers = #tpu.dot_dimension_numbers<[2], [1], [1], [2], [0, 0, 0, 1, 1, 2], [0], [0]>} : vector<2x8x8xbf16>, vector<2x8x128xbf16>, vector<2x8x128xf32> -> vector<2x8x128xf32>
    "tpu.trace_stop"() : () -> ()
    %c0_10 = arith.constant 0 : index
    %c0_11 = arith.constant 0 : index
    %c0_12 = arith.constant 0 : index
    %31 = vector.load %arg4[%c0_10, %c0_11, %c0_12] : memref<2x8x128xf32, #tpu.memory_space<vmem>>, vector<2x8x128xf32>
    tpu.vector_store %arg4[%c0_10, %c0_11, %c0_12], %30 {strides = array<i32>} : memref<2x8x128xf32, #tpu.memory_space<vmem>>, vector<2x8x128xf32>,
    return
  }
  func.func @transform_0(%arg0: i32) -> (i32, i32) {
    %c0_i32 = arith.constant 0 : i32
    %c0_i32_0 = arith.constant 0 : i32
    return %arg0, %c0_i32 : i32, i32
  }
  func.func @transform_1(%arg0: i32) -> (i32, i32) {
    %c0_i32 = arith.constant 0 : i32
    %c0_i32_0 = arith.constant 0 : i32
    %c0_i32_1 = arith.constant 0 : i32
    return %c0_i32, %c0_i32_0 : i32, i32
  }
  func.func @transform_2(%arg0: i32) -> (i32, i32) {
    %c0_i32 = arith.constant 0 : i32
    %c0_i32_0 = arith.constant 0 : i32
    %c0_i32_1 = arith.constant 0 : i32
    return %c0_i32, %c0_i32_0 : i32, i32
  }
  func.func @transform_3(%arg0: i32) -> (i32, i32, i32) {
    %c0_i32 = arith.constant 0 : i32
    %c0_i32_0 = arith.constant 0 : i32
    %c0_i32_1 = arith.constant 0 : i32
    return %arg0, %c0_i32, %c0_i32_0 : i32, i32, i32
  }
}

</mosaic_0001>

<llo_original>
// kernel: tpu_custom_call.1
$region0: #{tpu_custom_call.1}
  #allocation0 [shape = 'u32[]', space=smem, size = 0x4, offset = 0x4, fixed_abs, tag = 'smem constant byte address 0x4 - core index']
  #allocation1 [shape = 'u32[144,128]{1,0:T(1,128)}', space=vmem, size = 0x12000, scoped, tag = 'internal scratch']
  %s0 = inlined_call_operand.hbm [shape: bf16[16,128], index: 0, kind: input, shape index: {}]
  %s1 = inlined_call_operand.hbm [shape: bf16[128,384], index: 1, kind: input, shape index: {}]
  %s2 = inlined_call_operand.hbm [shape: f32[8,8], index: 2, kind: input, shape index: {}]
  %s3 = inlined_call_operand.hbm [shape: f32[2,8,128], index: 3, kind: output, shape index: {}]
  %s4 = sld [smem:[#allocation0]]
  $region34: #{tpu_custom_call.1} parent=0
    _
  %s6 = ssub.s32 1, %s4
  %s7 = scalar_select 0, %s6, %s4
  $region1: #{tpu_custom_call.1} parent=0
    #allocation2 [shape = 'u8[4096]{0}', space=vmem, size = 0x1000, scoped, tag = 'input window, operand 0, single buffered']
    #allocation3 [shape = 's32[1]{0}', space=sflag, size = 0x4, scoped, tag = 'scoped memory for tpu_custom_call.1']
    #allocation4 [shape = 's32[1]{0}', space=sflag, size = 0x4, scoped, tag = 'scoped memory for tpu_custom_call.1']
    #allocation5 [shape = 'u8[98304]{0}', space=vmem, size = 0x18000, scoped, tag = 'input window, operand 1, single buffered']
    #allocation6 [shape = 's32[1]{0}', space=sflag, size = 0x4, scoped, tag = 'scoped memory for tpu_custom_call.1']
    #allocation7 [shape = 'u8[4096]{0}', space=vmem, size = 0x1000, scoped, tag = 'input window, operand 2, single buffered']
    #allocation8 [shape = 'u8[8192]{0}', space=vmem, size = 0x2000, scoped, tag = 'output window, operand 0, single buffered']
    %8 = vsyncpa [#allocation3], 0
    %9 = vsyncpa [#allocation6], 0
    %10 = vsyncpa [#allocation4], 0
    // Predicated region
    $region2: #{tpu_custom_call.1} parent=1 // pred_check
      _
    $region3: #{tpu_custom_call.1} parent=1 // pred_check_branch
      %12 = sbr.rel (0) target = $region5
    $region4: #{tpu_custom_call.1} parent=1 // pred_region
      %s14 = ssub.s32 128, 128
      %15 = vsyncadd [#allocation3], %s14
      %s16 = sshll.u32 [#allocation2], 4
      %s17 = int_to_ptr.vmem [resolvable:$true] %s16
      %22 = dma.hbm_to_vmem [thread:$0]  %s0, 128, %s17, [#allocation3], 64, 64, 4
    $region5: #{tpu_custom_call.1} parent=1 // pred_fallthru
      _
    // Predicated region
    $region6: #{tpu_custom_call.1} parent=1 // pred_check
      _
    $region7: #{tpu_custom_call.1} parent=1 // pred_check_branch
      %24 = sbr.rel (0) target = $region9
    $region8: #{tpu_custom_call.1} parent=1 // pred_region
      %s26 = ssub.s32 3072, 3072
      %27 = vsyncadd [#allocation6], %s26
      %s28 = sshll.u32 [#allocation5], 4
      %s29 = int_to_ptr.vmem [resolvable:$true] %s28
      %34 = dma.hbm_to_vmem [thread:$0]  %s1, 3072, %s29, [#allocation6], 192, 192, 12
    $region9: #{tpu_custom_call.1} parent=1 // pred_fallthru
      _
    // Predicated region
    $region10: #{tpu_custom_call.1} parent=1 // pred_check
      _
    $region11: #{tpu_custom_call.1} parent=1 // pred_check_branch
      %36 = sbr.rel (0) target = $region13
    $region12: #{tpu_custom_call.1} parent=1 // pred_region
      %s38 = ssub.s32 128, 128
      %39 = vsyncadd [#allocation6], %s38
      %s41 = sshll.u32 [#allocation7], 4
      %s42 = int_to_ptr.vmem [resolvable:$true] %s41
      %44 = dma.hbm_to_vmem [thread:$0]  %s2, 128, %s42, [#allocation6]
    $region13: #{tpu_custom_call.1} parent=1 // pred_fallthru
      _
    // Predicated region
    $region14: #{tpu_custom_call.1} parent=1 // pred_check
      _
    $region15: #{tpu_custom_call.1} parent=1 // pred_check_branch
      %46 = sbr.rel (0) target = $region17
    $region16: #{tpu_custom_call.1} parent=1 // pred_region
      %47 = dma.done [#allocation3], 128
    $region17: #{tpu_custom_call.1} parent=1 // pred_fallthru
      _
    // Predicated region
    $region18: #{tpu_custom_call.1} parent=1 // pred_check
      _
    $region19: #{tpu_custom_call.1} parent=1 // pred_check_branch
      %49 = sbr.rel (0) target = $region21
    $region20: #{tpu_custom_call.1} parent=1 // pred_region
      %50 = dma.done [#allocation6], 3072
    $region21: #{tpu_custom_call.1} parent=1 // pred_fallthru
      _
    // Predicated region
    $region22: #{tpu_custom_call.1} parent=1 // pred_check
      _
    $region23: #{tpu_custom_call.1} parent=1 // pred_check_branch
      %52 = sbr.rel (0) target = $region25
    $region24: #{tpu_custom_call.1} parent=1 // pred_region
      %53 = dma.done [#allocation6], 128
    $region25: #{tpu_custom_call.1} parent=1 // pred_fallthru
      _
    %v55 = vld [vmem:[#allocation2] sm:$0xf]
    %v56 = vld [vmem:[#allocation2 + $0x4] sm:$0xf]
    %v57 = vld [vmem:[#allocation5] sm:$0xff]
    %v58 = vld [vmem:[#allocation5 + $0x8] sm:$0xf]
    %v59 = vld [vmem:[#allocation5 + $0xc] sm:$0xff]
    %v60 = vld [vmem:[#allocation5 + $0x14] sm:$0xf]
    %v61 = vld [vmem:[#allocation5 + $0x18] sm:$0xff]
    %v62 = vld [vmem:[#allocation5 + $0x20] sm:$0xf]
    %v63 = vld [vmem:[#allocation5 + $0x24] sm:$0xff]
    %v64 = vld [vmem:[#allocation5 + $0x2c] sm:$0xf]
    %v65 = vld [vmem:[#allocation5 + $0x30] sm:$0xff]
    %v66 = vld [vmem:[#allocation5 + $0x38] sm:$0xf]
    %v67 = vld [vmem:[#allocation5 + $0x3c] sm:$0xff]
    %v68 = vld [vmem:[#allocation5 + $0x44] sm:$0xf]
    %v69 = vld [vmem:[#allocation5 + $0x48] sm:$0xff]
    %v70 = vld [vmem:[#allocation5 + $0x50] sm:$0xf]
    %v71 = vld [vmem:[#allocation5 + $0x54] sm:$0xff]
    %v72 = vld [vmem:[#allocation5 + $0x5c] sm:$0xf]
    %v73 = vld [vmem:[#allocation5 + $0x60] sm:$0xff]
    %v74 = vld [vmem:[#allocation5 + $0x68] sm:$0xf]
    %v75 = vld [vmem:[#allocation5 + $0x6c] sm:$0xff]
    %v76 = vld [vmem:[#allocation5 + $0x74] sm:$0xf]
    %v77 = vld [vmem:[#allocation5 + $0x78] sm:$0xff]
    %v78 = vld [vmem:[#allocation5 + $0x80] sm:$0xf]
    %v79 = vld [vmem:[#allocation5 + $0x84] sm:$0xff]
    %v80 = vld [vmem:[#allocation5 + $0x8c] sm:$0xf]
    %v81 = vld [vmem:[#allocation5 + $0x90] sm:$0xff]
    %v82 = vld [vmem:[#allocation5 + $0x98] sm:$0xf]
    %v83 = vld [vmem:[#allocation5 + $0x9c] sm:$0xff]
    %v84 = vld [vmem:[#allocation5 + $0xa4] sm:$0xf]
    %v85 = vld [vmem:[#allocation5 + $0xa8] sm:$0xff]
    %v86 = vld [vmem:[#allocation5 + $0xb0] sm:$0xf]
    %v87 = vld [vmem:[#allocation5 + $0xb4] sm:$0xff]
    %v88 = vld [vmem:[#allocation5 + $0xbc] sm:$0xf]
    %v91 = vunpack.c.l.b16 %v55
    %v92 = vunpack.c.l.b16 %v56
    %v93 = vpack.c.b16 %v92, %v91
    %v127 = vunpack.c.l.b16 %v57
    %v128 = vunpack.c.h.b16 %v57
    %v129 = vunpack.c.l.b16 %v58
    %v130 = vunpack.c.l.b16 %v59
    %v131 = vunpack.c.h.b16 %v59
    %v132 = vunpack.c.l.b16 %v60
    %v133 = vunpack.c.l.b16 %v61
    %v134 = vunpack.c.h.b16 %v61
    %v135 = vunpack.c.l.b16 %v62
    %v136 = vunpack.c.l.b16 %v63
    %v137 = vunpack.c.h.b16 %v63
    %v138 = vunpack.c.l.b16 %v64
    %v139 = vunpack.c.l.b16 %v65
    %v140 = vunpack.c.h.b16 %v65
    %v141 = vunpack.c.l.b16 %v66
    %v142 = vunpack.c.l.b16 %v67
    %v143 = vunpack.c.h.b16 %v67
    %v144 = vunpack.c.l.b16 %v68
    %v145 = vunpack.c.l.b16 %v69
    %v146 = vunpack.c.h.b16 %v69
    %v147 = vunpack.c.l.b16 %v70
    %v148 = vunpack.c.l.b16 %v71
    %v149 = vunpack.c.h.b16 %v71
    %v150 = vunpack.c.l.b16 %v72
    %v151 = vunpack.c.l.b16 %v73
    %v152 = vunpack.c.h.b16 %v73
    %v153 = vunpack.c.l.b16 %v74
    %v154 = vunpack.c.l.b16 %v75
    %v155 = vunpack.c.h.b16 %v75
    %v156 = vunpack.c.l.b16 %v76
    %v157 = vunpack.c.l.b16 %v77
    %v158 = vunpack.c.h.b16 %v77
    %v159 = vunpack.c.l.b16 %v78
    %v160 = vunpack.c.l.b16 %v79
    %v161 = vunpack.c.h.b16 %v79
    %v162 = vunpack.c.l.b16 %v80
    %v163 = vunpack.c.l.b16 %v81
    %v164 = vunpack.c.h.b16 %v81
    %v165 = vunpack.c.l.b16 %v82
    %v166 = vunpack.c.l.b16 %v83
    %v167 = vunpack.c.h.b16 %v83
    %v168 = vunpack.c.l.b16 %v84
    %v169 = vunpack.c.l.b16 %v85
    %v170 = vunpack.c.h.b16 %v85
    %v171 = vunpack.c.l.b16 %v86
    %v172 = vunpack.c.l.b16 %v87
    %v173 = vunpack.c.h.b16 %v87
    %v174 = vunpack.c.l.b16 %v88
    %v175 = vpack.c.b16 %v130, %v127
    %v176 = vpack.c.b16 %v131, %v128
    %v177 = vpack.c.b16 %v132, %v129
    %v178 = vpack.c.b16 %v136, %v133
    %v179 = vpack.c.b16 %v137, %v134
    %v180 = vpack.c.b16 %v138, %v135
    %v181 = vpack.c.b16 %v142, %v139
    %v182 = vpack.c.b16 %v143, %v140
    %v183 = vpack.c.b16 %v144, %v141
    %v184 = vpack.c.b16 %v148, %v145
    %v185 = vpack.c.b16 %v149, %v146
    %v186 = vpack.c.b16 %v150, %v147
    %v187 = vpack.c.b16 %v154, %v151
    %v188 = vpack.c.b16 %v155, %v152
    %v189 = vpack.c.b16 %v156, %v153
    %v190 = vpack.c.b16 %v160, %v157
    %v191 = vpack.c.b16 %v161, %v158
    %v192 = vpack.c.b16 %v162, %v159
    %v193 = vpack.c.b16 %v166, %v163
    %v194 = vpack.c.b16 %v167, %v164
    %v195 = vpack.c.b16 %v168, %v165
    %v196 = vpack.c.b16 %v172, %v169
    %v197 = vpack.c.b16 %v173, %v170
    %v198 = vpack.c.b16 %v174, %v171
    %223 = vmatprep.subr.bf16.mxu0 %v176
    %224 = vmatpush1.bf16.msra.mxu0 %v175
    %225 = vmatprep.subr.bf16.mxu0 %v179
    %226 = vmatpush1.bf16.msra.mxu0 %v178
    %227 = vmatprep.subr.bf16.mxu0 %v182
    %228 = vmatpush1.bf16.msra.mxu0 %v181
    %229 = vmatprep.subr.bf16.mxu0 %v185
    %230 = vmatpush1.bf16.msra.mxu0 %v184
    %231 = vmatprep.subr.bf16.mxu0 %v188
    %232 = vmatpush1.bf16.msra.mxu0 %v187
    %233 = vmatprep.subr.bf16.mxu0 %v191
    %234 = vmatpush1.bf16.msra.mxu0 %v190
    %235 = vmatprep.subr.bf16.mxu0 %v194
    %236 = vmatpush1.bf16.msra.mxu0 %v193
    %237 = vmatprep.subr.bf16.mxu0 %v197
    %238 = vmatpush1.bf16.msra.mxu0 %v196
    %239 = vmatprep.subr.bf16.mxu0 0
    %240 = vmatpush1.bf16.msra.mxu0 0
    %241 = vmatprep.subr.bf16.mxu0 0
    %242 = vmatpush1.bf16.msra.mxu0 0
    %243 = vmatprep.subr.bf16.mxu0 0
    %244 = vmatpush1.bf16.msra.mxu0 0
    %245 = vmatprep.subr.bf16.mxu0 0
    %246 = vmatpush1.bf16.msra.mxu0 0
    %247 = vmatprep.subr.bf16.mxu0 0
    %248 = vmatpush1.bf16.msra.mxu0 0
    %249 = vmatprep.subr.bf16.mxu0 0
    %250 = vmatpush1.bf16.msra.mxu0 0
    %251 = vmatprep.subr.bf16.mxu0 0
    %252 = vmatpush1.bf16.msra.mxu0 0
    %253 = vmatprep.subr.bf16.mxu0 0
    %254 = vmatpush1.bf16.msra.mxu0 0
    %255 = vmatprep.mubr.bf16.mxu0 0
    %256 = vmatmul.mubr.bf16.gmra.mrb[0].mxu0 %v93
    %v257 = vpop.f32.mrb[0].mxu0
    %v258 = vadd.f32 0.0, %v257
    %v259 = vpop.f32.mrb[0].mxu0
    %v260 = vadd.f32 0.0, %v259
    %v261 = vpop.f32.mrb[0].mxu0
    %v262 = vadd.f32 0.0, %v261
    %v263 = vpop.f32.mrb[0].mxu0
    %v264 = vadd.f32 0.0, %v263
    %265 = vdwg.mxu0
    %266 = vmatprep.subr.bf16.mxu0 0
    %267 = vmatpush1.bf16.msra.mxu0 %v177
    %268 = vmatprep.subr.bf16.mxu0 0
    %269 = vmatpush1.bf16.msra.mxu0 %v180
    %270 = vmatprep.subr.bf16.mxu0 0
    %271 = vmatpush1.bf16.msra.mxu0 %v183
    %272 = vmatprep.subr.bf16.mxu0 0
    %273 = vmatpush1.bf16.msra.mxu0 %v186
    %274 = vmatprep.subr.bf16.mxu0 0
    %275 = vmatpush1.bf16.msra.mxu0 %v189
    %276 = vmatprep.subr.bf16.mxu0 0
    %277 = vmatpush1.bf16.msra.mxu0 %v192
    %278 = vmatprep.subr.bf16.mxu0 0
    %279 = vmatpush1.bf16.msra.mxu0 %v195
    %280 = vmatprep.subr.bf16.mxu0 0
    %281 = vmatpush1.bf16.msra.mxu0 %v198
    %282 = vmatprep.subr.bf16.mxu0 0
    %283 = vmatpush1.bf16.msra.mxu0 0
    %284 = vmatprep.subr.bf16.mxu0 0
    %285 = vmatpush1.bf16.msra.mxu0 0
    %286 = vmatprep.subr.bf16.mxu0 0
    %287 = vmatpush1.bf16.msra.mxu0 0
    %288 = vmatprep.subr.bf16.mxu0 0
    %289 = vmatpush1.bf16.msra.mxu0 0
    %290 = vmatprep.subr.bf16.mxu0 0
    %291 = vmatpush1.bf16.msra.mxu0 0
    %292 = vmatprep.subr.bf16.mxu0 0
    %293 = vmatpush1.bf16.msra.mxu0 0
    %294 = vmatprep.subr.bf16.mxu0 0
    %295 = vmatpush1.bf16.msra.mxu0 0
    %296 = vmatprep.subr.bf16.mxu0 0
    %297 = vmatpush1.bf16.msra.mxu0 0
    %298 = vmatprep.mubr.bf16.mxu0 0
    %299 = vmatmul.mubr.bf16.gmra.mrb[0].mxu0 %v93
    %v300 = vpop.f32.mrb[0].mxu0
    %v301 = vadd.f32 0.0, %v300
    %v302 = vpop.f32.mrb[0].mxu0
    %v303 = vpop.f32.mrb[0].mxu0
    %v304 = vadd.f32 0.0, %v303
    %v305 = vpop.f32.mrb[0].mxu0
    %306 = vdwg.mxu0
    %v307 = vmul.f32 %v258, 0.125
    %v308 = vmul.f32 %v262, 0.125
    %v309 = vpack.c.bf16 %v307, %v307
    %v310 = vpack.c.bf16 %v308, %v308
    %v311 = vpack.c.bf16 %v260, %v260
    %v312 = vpack.c.bf16 %v264, %v264
    %v313 = vpack.c.bf16 %v301, %v301
    %v314 = vpack.c.bf16 %v304, %v304
    %v315 = vld [vmem:[#allocation7] sm:$0xff]
    %316 = vmatprep.subr.bf16.mxu0 0
    %317 = vmatpush1.bf16.xpose.msra.mxu0 %v311
    %318 = vmatprep.subr.bf16.mxu0 0
    %319 = vmatpush1.bf16.xpose.msra.mxu0 0
    %320 = vmatprep.subr.bf16.mxu0 0
    %321 = vmatpush1.bf16.xpose.msra.mxu0 0
    %322 = vmatprep.subr.bf16.mxu0 0
    %323 = vmatpush1.bf16.xpose.msra.mxu0 0
    %324 = vmatprep.subr.bf16.mxu0 0
    %325 = vmatpush1.bf16.xpose.msra.mxu0 0
    %326 = vmatprep.subr.bf16.mxu0 0
    %327 = vmatpush1.bf16.xpose.msra.mxu0 0
    %328 = vmatprep.subr.bf16.mxu0 0
    %329 = vmatpush1.bf16.xpose.msra.mxu0 0
    %330 = vmatprep.subr.bf16.mxu0 0
    %331 = vmatpush1.bf16.xpose.msra.mxu0 0
    %332 = vmatprep.subr.bf16.mxu0 0
    %333 = vmatpush1.bf16.xpose.msra.mxu0 0
    %334 = vmatprep.subr.bf16.mxu0 0
    %335 = vmatpush1.bf16.xpose.msra.mxu0 0
    %336 = vmatprep.subr.bf16.mxu0 0
    %337 = vmatpush1.bf16.xpose.msra.mxu0 0
    %338 = vmatprep.subr.bf16.mxu0 0
    %339 = vmatpush1.bf16.xpose.msra.mxu0 0
    %340 = vmatprep.subr.bf16.mxu0 0
    %341 = vmatpush1.bf16.xpose.msra.mxu0 0
    %342 = vmatprep.subr.bf16.mxu0 0
    %343 = vmatpush1.bf16.xpose.msra.mxu0 0
    %344 = vmatprep.subr.bf16.mxu0 0
    %345 = vmatpush1.bf16.xpose.msra.mxu0 0
    %346 = vmatprep.subr.bf16.mxu0 0
    %347 = vmatpush1.bf16.xpose.msra.mxu0 0
    %348 = vmatprep.mubr.bf16.mxu0 0
    %349 = vmatmul.mubr.bf16.gmra.mrb[0].mxu0 %v309
    %v350 = vpop.f32.mrb[0].mxu0
    %v351 = vadd.f32 %v315, %v350
    %v352 = vpop.f32.mrb[0].mxu0
    %v353 = vpop.f32.mrb[0].mxu0
    %v354 = vpop.f32.mrb[0].mxu0
    %355 = vdwg.mxu0
    %356 = vmatprep.subr.bf16.mxu0 0
    %357 = vmatpush1.bf16.xpose.msra.mxu0 %v312
    %358 = vmatprep.subr.bf16.mxu0 0
    %359 = vmatpush1.bf16.xpose.msra.mxu0 0
    %360 = vmatprep.subr.bf16.mxu0 0
    %361 = vmatpush1.bf16.xpose.msra.mxu0 0
    %362 = vmatprep.subr.bf16.mxu0 0
    %363 = vmatpush1.bf16.xpose.msra.mxu0 0
    %364 = vmatprep.subr.bf16.mxu0 0
    %365 = vmatpush1.bf16.xpose.msra.mxu0 0
    %366 = vmatprep.subr.bf16.mxu0 0
    %367 = vmatpush1.bf16.xpose.msra.mxu0 0
    %368 = vmatprep.subr.bf16.mxu0 0
    %369 = vmatpush1.bf16.xpose.msra.mxu0 0
    %370 = vmatprep.subr.bf16.mxu0 0
    %371 = vmatpush1.bf16.xpose.msra.mxu0 0
    %372 = vmatprep.subr.bf16.mxu0 0
    %373 = vmatpush1.bf16.xpose.msra.mxu0 0
    %374 = vmatprep.subr.bf16.mxu0 0
    %375 = vmatpush1.bf16.xpose.msra.mxu0 0
    %376 = vmatprep.subr.bf16.mxu0 0
    %377 = vmatpush1.bf16.xpose.msra.mxu0 0
    %378 = vmatprep.subr.bf16.mxu0 0
    %379 = vmatpush1.bf16.xpose.msra.mxu0 0
    %380 = vmatprep.subr.bf16.mxu0 0
    %381 = vmatpush1.bf16.xpose.msra.mxu0 0
    %382 = vmatprep.subr.bf16.mxu0 0
    %383 = vmatpush1.bf16.xpose.msra.mxu0 0
    %384 = vmatprep.subr.bf16.mxu0 0
    %385 = vmatpush1.bf16.xpose.msra.mxu0 0
    %386 = vmatprep.subr.bf16.mxu0 0
    %387 = vmatpush1.bf16.xpose.msra.mxu0 0
    %388 = vmatprep.mubr.bf16.mxu0 0
    %389 = vmatmul.mubr.bf16.gmra.mrb[0].mxu0 %v310
    %v390 = vpop.f32.mrb[0].mxu0
    %v391 = vadd.f32 %v315, %v390
    %v392 = vpop.f32.mrb[0].mxu0
    %v393 = vpop.f32.mrb[0].mxu0
    %v394 = vpop.f32.mrb[0].mxu0
    %395 = vdwg.mxu0
    %vm396 = vcmask 64512
    %v397 = vsel %vm396, %v351, -inf
    %398 = vmax.xlane.f32.xlu0 %v397
    %v399 = vpop.xlane.xlu0 %398
    %v400 = vsel %vm396, %v391, -inf
    %401 = vmax.xlane.f32.xlu0 %v400
    %v402 = vpop.xlane.xlu0 %401
    %v403 = vsub.f32 %v351, %v399
    %v404 = vsub.f32 %v391, %v402
    %v405 = vmul.f32 %v403, 1.442695
    %v406 = vpow.pop %v405
    %v407 = vmul.f32 %v404, 1.442695
    %v408 = vpow.pop %v407
    %v409 = vsel %vm396, %v406, 0.0
    %410 = vadd.xlane.f32.xlu0 %v409
    %v411 = vpop.xlane.xlu0 %410
    %v412 = vsel %vm396, %v408, 0.0
    %413 = vadd.xlane.f32.xlu0 %v412
    %v414 = vpop.xlane.xlu0 %413
    %v415 = vrcp.pop %v411
    %v416 = vrcp.pop %v414
    %v417 = vmul.f32 %v406, %v415
    %v418 = vmul.f32 %v408, %v416
    %v419 = vpack.c.bf16 %v417, %v417
    %v420 = vpack.c.bf16 %v418, %v418
    %v422 = vsel %vm396, %v419, 0
    %vm424 = vcmask 1043456
    %v426 = vsel %vm424, %v313, 0
    %428 = vmatprep.subr.bf16.mxu0 0
    %429 = vmatpush1.bf16.msra.mxu0 %v426
    %430 = vmatprep.subr.bf16.mxu0 0
    %431 = vmatpush1.bf16.msra.mxu0 0
    %432 = vmatprep.subr.bf16.mxu0 0
    %433 = vmatpush1.bf16.msra.mxu0 0
    %434 = vmatprep.subr.bf16.mxu0 0
    %435 = vmatpush1.bf16.msra.mxu0 0
    %436 = vmatprep.subr.bf16.mxu0 0
    %437 = vmatpush1.bf16.msra.mxu0 0
    %438 = vmatprep.subr.bf16.mxu0 0
    %439 = vmatpush1.bf16.msra.mxu0 0
    %440 = vmatprep.subr.bf16.mxu0 0
    %441 = vmatpush1.bf16.msra.mxu0 0
    %442 = vmatprep.subr.bf16.mxu0 0
    %443 = vmatpush1.bf16.msra.mxu0 0
    %444 = vmatprep.subr.bf16.mxu0 0
    %445 = vmatpush1.bf16.msra.mxu0 0
    %446 = vmatprep.subr.bf16.mxu0 0
    %447 = vmatpush1.bf16.msra.mxu0 0
    %448 = vmatprep.subr.bf16.mxu0 0
    %449 = vmatpush1.bf16.msra.mxu0 0
    %450 = vmatprep.subr.bf16.mxu0 0
    %451 = vmatpush1.bf16.msra.mxu0 0
    %452 = vmatprep.subr.bf16.mxu0 0
    %453 = vmatpush1.bf16.msra.mxu0 0
    %454 = vmatprep.subr.bf16.mxu0 0
    %455 = vmatpush1.bf16.msra.mxu0 0
    %456 = vmatprep.subr.bf16.mxu0 0
    %457 = vmatpush1.bf16.msra.mxu0 0
    %458 = vmatprep.subr.bf16.mxu0 0
    %459 = vmatpush1.bf16.msra.mxu0 0
    %460 = vmatprep.mubr.bf16.mxu0 0
    %461 = vmatmul.mubr.bf16.gmra.mrb[0].mxu0 %v422
    %v462 = vpop.f32.mrb[0].mxu0
    %v463 = vadd.f32 0.0, %v462
    %v464 = vpop.f32.mrb[0].mxu0
    %v465 = vpop.f32.mrb[0].mxu0
    %v466 = vpop.f32.mrb[0].mxu0
    %467 = vdwg.mxu0
    %v469 = vsel %vm396, %v420, 0
    %v472 = vsel %vm424, %v314, 0
    %474 = vmatprep.subr.bf16.mxu0 0
    %475 = vmatpush1.bf16.msra.mxu0 %v472
    %476 = vmatprep.subr.bf16.mxu0 0
    %477 = vmatpush1.bf16.msra.mxu0 0
    %478 = vmatprep.subr.bf16.mxu0 0
    %479 = vmatpush1.bf16.msra.mxu0 0
    %480 = vmatprep.subr.bf16.mxu0 0
    %481 = vmatpush1.bf16.msra.mxu0 0
    %482 = vmatprep.subr.bf16.mxu0 0
    %483 = vmatpush1.bf16.msra.mxu0 0
    %484 = vmatprep.subr.bf16.mxu0 0
    %485 = vmatpush1.bf16.msra.mxu0 0
    %486 = vmatprep.subr.bf16.mxu0 0
    %487 = vmatpush1.bf16.msra.mxu0 0
    %488 = vmatprep.subr.bf16.mxu0 0
    %489 = vmatpush1.bf16.msra.mxu0 0
    %490 = vmatprep.subr.bf16.mxu0 0
    %491 = vmatpush1.bf16.msra.mxu0 0
    %492 = vmatprep.subr.bf16.mxu0 0
    %493 = vmatpush1.bf16.msra.mxu0 0
    %494 = vmatprep.subr.bf16.mxu0 0
    %495 = vmatpush1.bf16.msra.mxu0 0
    %496 = vmatprep.subr.bf16.mxu0 0
    %497 = vmatpush1.bf16.msra.mxu0 0
    %498 = vmatprep.subr.bf16.mxu0 0
    %499 = vmatpush1.bf16.msra.mxu0 0
    %500 = vmatprep.subr.bf16.mxu0 0
    %501 = vmatpush1.bf16.msra.mxu0 0
    %502 = vmatprep.subr.bf16.mxu0 0
    %503 = vmatpush1.bf16.msra.mxu0 0
    %504 = vmatprep.subr.bf16.mxu0 0
    %505 = vmatpush1.bf16.msra.mxu0 0
    %506 = vmatprep.mubr.bf16.mxu0 0
    %507 = vmatmul.mubr.bf16.gmra.mrb[0].mxu0 %v469
    %v508 = vpop.f32.mrb[0].mxu0
    %v509 = vadd.f32 0.0, %v508
    %v510 = vpop.f32.mrb[0].mxu0
    %v511 = vpop.f32.mrb[0].mxu0
    %v512 = vpop.f32.mrb[0].mxu0
    %513 = vdwg.mxu0
    %514 = vst [vmem:[#allocation8] sm:$0xff] %v463
    %515 = vst [vmem:[#allocation8 + $0x8] sm:$0xff] %v509
    // Predicated region
    $region26: #{tpu_custom_call.1} parent=1 // pred_check
      _
    $region27: #{tpu_custom_call.1} parent=1 // pred_check_branch
      %517 = sbr.rel (0) target = $region29
    $region28: #{tpu_custom_call.1} parent=1 // pred_region
      %s519 = ssub.s32 256, 256
      %520 = vsyncadd [#allocation4], %s519
      %s521 = sshll.u32 [#allocation8], 4
      %s522 = int_to_ptr.vmem [resolvable:$true] %s521
      %527 = dma.vmem_to_hbm [thread:$0]  %s522, 256, %s3, [#allocation4], 128, 128, 8
    $region29: #{tpu_custom_call.1} parent=1 // pred_fallthru
      _
    // Predicated region
    $region30: #{tpu_custom_call.1} parent=1 // pred_check
      _
    $region31: #{tpu_custom_call.1} parent=1 // pred_check_branch
      %529 = sbr.rel (0) target = $region33
    $region32: #{tpu_custom_call.1} parent=1 // pred_region
      %530 = dma.done [#allocation4], 256
    $region33: #{tpu_custom_call.1} parent=1 // pred_fallthru
      _
    %531 = vsyncpa [#allocation3], 1
    %532 = vsyncpa [#allocation6], 1
    %533 = vsyncpa [#allocation4], 1

</llo_original>
